<compile_context>
chip_gen: v7x
topology: tpu7x:2x2x1
jax: 0.10.0
libtpu: 0.0.40
codegen_flags: <defaults>
</compile_context>

<pallas_src>
import functools

import jax
import jax.numpy as jnp
from jax.experimental import pallas as pl
from jax.experimental.pallas import tpu as pltpu

_LN_EPS = 1e-5


def _round_up(n, m):
    return ((n + m - 1) // m) * m


def actor_fc_kernel(
    x_ref,      # (tm, input_size)          streamed per grid step
    w1_ref,     # (input_size, Dh)          resident
    wh_ref,     # (2, Dh, Dh)  [W2; W3]     resident
    wmu_ref,    # (Dh, Np)                  resident
    vec_ref,    # (9, Dh)  [b1,g1,be1, b2,g2,be2, b3,g3,be3]  resident
    bmu_ref,    # (1, Np)                   resident
    out_ref,    # (tm, Np)                  streamed per grid step
    *, fc1_dims, fc2_dims, fc3_dims, n_actions,
):
    x = x_ref[...]
    Dh = wh_ref.shape[-1]
    Np = out_ref.shape[-1]

    # Lane-index mask for the zero-padded hidden dims (hoisted, reused).
    col = jax.lax.broadcasted_iota(jnp.int32, (1, Dh), 1)

    def ln_relu(h, dim, g, b):
        # Padded lanes of h are exactly 0 (zero-padded weights/biases), so the
        # plain sum over Dh equals the sum over the real `dim` columns.
        inv_d = 1.0 / float(dim)
        mask = col < dim
        mean = jnp.sum(h, axis=-1, keepdims=True) * inv_d
        centered = jnp.where(mask, h - mean, 0.0)
        var = jnp.sum(centered * centered, axis=-1, keepdims=True) * inv_d
        hn = centered * jax.lax.rsqrt(var + _LN_EPS)
        hn = hn * g + b          # gamma/beta are 0 in padding -> padding stays 0
        return jnp.maximum(hn, 0.0)

    # fc1 -> LayerNorm -> ReLU
    h = jnp.dot(x, w1_ref[...], preferred_element_type=jnp.float32) + vec_ref[0:1, :]
    h = ln_relu(h, fc1_dims, vec_ref[1:2, :], vec_ref[2:3, :])

    # fc2 -> LayerNorm -> ReLU
    h = jnp.dot(h, wh_ref[0], preferred_element_type=jnp.float32) + vec_ref[3:4, :]
    h = ln_relu(h, fc2_dims, vec_ref[4:5, :], vec_ref[5:6, :])

    # fc3 -> LayerNorm -> ReLU
    h = jnp.dot(h, wh_ref[1], preferred_element_type=jnp.float32) + vec_ref[6:7, :]
    h = ln_relu(h, fc3_dims, vec_ref[7:8, :], vec_ref[8:9, :])

    # mu -> masked, numerically-stable softmax over the real n_actions columns.
    logits = jnp.dot(h, wmu_ref[...], preferred_element_type=jnp.float32) + bmu_ref[...]
    ocol = jax.lax.broadcasted_iota(jnp.int32, (1, Np), 1)
    logits = jnp.where(ocol < n_actions, logits, -1e30)
    logits = logits - jnp.max(logits, axis=-1, keepdims=True)
    e = jnp.exp(logits)
    denom = jnp.sum(e, axis=-1, keepdims=True)
    out_ref[...] = e / denom


def pack_params(params, fc1_dims, fc2_dims, fc3_dims, n_actions):
    """Zero-pad feature dims to multiples of 128 and pack 14 params into 5 arrays."""
    Dh = _round_up(max(fc1_dims, fc2_dims, fc3_dims), 128)
    Np = _round_up(n_actions, 128)
    input_size = params["w1"].shape[0]

    def pad2(a, r, c):
        return jnp.pad(a, ((0, r - a.shape[0]), (0, c - a.shape[1])))

    def padv(a, c):
        return jnp.pad(a, ((0, 0), (0, c - a.shape[1])))

    wh = jnp.stack([pad2(params["w2"], Dh, Dh), pad2(params["w3"], Dh, Dh)], axis=0)
    vecs = jnp.concatenate(
        [padv(params["b1"], Dh), padv(params["g1"], Dh), padv(params["be1"], Dh),
         padv(params["b2"], Dh), padv(params["g2"], Dh), padv(params["be2"], Dh),
         padv(params["b3"], Dh), padv(params["g3"], Dh), padv(params["be3"], Dh)],
        axis=0)  # (9, Dh)

    return {
        "w1": pad2(params["w1"], input_size, Dh),   # (input_size, Dh)
        "wh": wh,                                   # (2, Dh, Dh)
        "wmu": pad2(params["wmu"], Dh, Np),         # (Dh, Np)
        "vecs": vecs,                               # (9, Dh)
        "bmu": padv(params["bmu"], Np),             # (1, Np)
    }


def actor_fc_forward(x, packed, *, fc1_dims, fc2_dims, fc3_dims, n_actions,
                     block_batch=512):
    """x: (B, input_size) f32. packed: output of pack_params."""
    B, input_size = x.shape
    Dh = packed["wh"].shape[-1]
    Np = packed["bmu"].shape[-1]

    # Batch tile: multiple of 8 sublanes, capped by the (padded) batch.
    tm = min(block_batch, _round_up(B, 8))
    B_pad = _round_up(B, tm)
    if B_pad != B:
        x = jnp.pad(x, ((0, B_pad - B), (0, 0)))

    kernel = functools.partial(
        actor_fc_kernel,
        fc1_dims=fc1_dims, fc2_dims=fc2_dims, fc3_dims=fc3_dims,
        n_actions=n_actions)

    out = pl.pallas_call(
        kernel,
        out_shape=jax.ShapeDtypeStruct((B_pad, Np), jnp.float32),
        grid=(B_pad // tm,),
        in_specs=[
            pl.BlockSpec((tm, input_size), lambda i: (i, 0)),   # x: streamed
            pl.BlockSpec((input_size, Dh), lambda i: (0, 0)),   # W1: resident
            pl.BlockSpec((2, Dh, Dh), lambda i: (0, 0, 0)),     # W2/W3: resident
            pl.BlockSpec((Dh, Np), lambda i: (0, 0)),           # Wmu: resident
            pl.BlockSpec((9, Dh), lambda i: (0, 0)),            # b/gamma/beta: resident
            pl.BlockSpec((1, Np), lambda i: (0, 0)),            # mu bias: resident
        ],
        out_specs=pl.BlockSpec((tm, Np), lambda i: (i, 0)),
        compiler_params=pltpu.CompilerParams(
            dimension_semantics=("parallel",)),                  # v7x: 2 TCs
    )(x, packed["w1"], packed["wh"], packed["wmu"], packed["vecs"], packed["bmu"])

    return out[:B, :n_actions]


def init_params(key, n_actions, fc1_dims, fc2_dims, fc3_dims):
    """Deterministic init matching the PyTorch module's __init__ ranges."""
    input_size = (n_actions - 1) * 7 + n_actions
    ks = jax.random.split(key, 8)

    f1 = 1.0 / jnp.sqrt(jnp.float32(input_size))
    f2 = 1.0 / jnp.sqrt(jnp.float32(fc1_dims))
    f3 = 0.003
    fmu = 1.0 / jnp.sqrt(jnp.float32(fc3_dims))  # nn.Linear default for `mu`

    def uni(k, shape, bound):
        return jax.random.uniform(k, shape, jnp.float32, -bound, bound)

    params = {
        # Linear weights stored as (in, out) == PyTorch weight.T
        "w1": uni(ks[0], (input_size, fc1_dims), f1),
        "b1": uni(ks[1], (1, fc1_dims), f1),
        "g1": jnp.ones((1, fc1_dims), jnp.float32),
        "be1": jnp.zeros((1, fc1_dims), jnp.float32),
        "w2": uni(ks[2], (fc1_dims, fc2_dims), f2),
        "b2": uni(ks[3], (1, fc2_dims), f2),
        "g2": jnp.ones((1, fc2_dims), jnp.float32),
        "be2": jnp.zeros((1, fc2_dims), jnp.float32),
        "w3": uni(ks[4], (fc2_dims, fc3_dims), f3),
        "b3": uni(ks[5], (1, fc3_dims), f3),
        "g3": jnp.ones((1, fc3_dims), jnp.float32),
        "be3": jnp.zeros((1, fc3_dims), jnp.float32),
        "wmu": uni(ks[6], (fc3_dims, n_actions), fmu),
        "bmu": uni(ks[7], (1, n_actions), fmu),
    }
    return params, input_size


def reference_forward(x, p):
    """Pure-JAX reference for correctness checking (natural, unpadded params)."""
    def ln_relu(h, g, b):
        m = jnp.mean(h, axis=-1, keepdims=True)
        v = jnp.mean((h - m) ** 2, axis=-1, keepdims=True)
        return jnp.maximum((h - m) / jnp.sqrt(v + _LN_EPS) * g + b, 0.0)

    h = ln_relu(x @ p["w1"] + p["b1"], p["g1"], p["be1"])
    h = ln_relu(h @ p["w2"] + p["b2"], p["g2"], p["be2"])
    h = ln_relu(h @ p["w3"] + p["b3"], p["g3"], p["be3"])
    return jax.nn.softmax(h @ p["wmu"] + p["bmu"], axis=-1)


if __name__ == "__main__":
    n_actions = 4          # input_size = (4-1)*7 + 4 = 25
    fc1_dims, fc2_dims, fc3_dims = 32, 32, 32
    batch = 16

    key = jax.random.PRNGKey(0)
    kparams, kx = jax.random.split(key)
    params, input_size = init_params(kparams, n_actions, fc1_dims, fc2_dims, fc3_dims)
    x = jax.random.normal(kx, (batch, input_size), jnp.float32)

    packed = pack_params(params, fc1_dims, fc2_dims, fc3_dims, n_actions)
    out = actor_fc_forward(
        x, packed,
        fc1_dims=fc1_dims, fc2_dims=fc2_dims, fc3_dims=fc3_dims,
        n_actions=n_actions)
    out = jax.block_until_ready(out)

    ref = reference_forward(x, params)
    assert out.shape == (batch, n_actions)
    # Softmax rows sum to 1 (exact divide in-kernel -> tight tolerance is fine).
    assert jnp.allclose(jnp.sum(out, axis=-1), 1.0, atol=1e-3)
    assert jnp.allclose(out, ref, atol=1e-3, rtol=1e-3)

    print("KERNEL_OK")
</pallas_src>

<mosaic_0001>
module attributes {stable_mosaic.version = 11 : i64} {
  func.func @actor_fc_kernel(%arg0: i32, %arg1: memref<16x25xf32, #tpu.memory_space<vmem>>, %arg2: memref<25x128xf32, #tpu.memory_space<vmem>>, %arg3: memref<2x128x128xf32, #tpu.memory_space<vmem>>, %arg4: memref<128x128xf32, #tpu.memory_space<vmem>>, %arg5: memref<9x128xf32, #tpu.memory_space<vmem>>, %arg6: memref<1x128xf32, #tpu.memory_space<vmem>>, %arg7: memref<16x128xf32, #tpu.memory_space<vmem>>) attributes {dimension_semantics = [#tpu.dimension_semantics<parallel>], iteration_bounds = array<i64: 1>, scalar_prefetch = 0 : i64, scratch_operands = 0 : i64, tpu.core_type = #tpu.core_type<tc>, window_params = [{transform_indices = @transform_0, window_bounds = array<i64: 16, 25>}, {pipeline_mode = #tpu.pipeline_mode<synchronous>, transform_indices = @transform_1, window_bounds = array<i64: 25, 128>}, {pipeline_mode = #tpu.pipeline_mode<synchronous>, transform_indices = @transform_2, window_bounds = array<i64: 2, 128, 128>}, {pipeline_mode = #tpu.pipeline_mode<synchronous>, transform_indices = @transform_3, window_bounds = array<i64: 128, 128>}, {pipeline_mode = #tpu.pipeline_mode<synchronous>, transform_indices = @transform_4, window_bounds = array<i64: 9, 128>}, {pipeline_mode = #tpu.pipeline_mode<synchronous>, transform_indices = @transform_5, window_bounds = array<i64: 1, 128>}, {transform_indices = @transform_6, window_bounds = array<i64: 16, 128>}]} {
    %c0 = arith.constant 0 : index
    %c0_0 = arith.constant 0 : index
    %0 = vector.load %arg1[%c0, %c0_0] : memref<16x25xf32, #tpu.memory_space<vmem>>, vector<16x25xf32>
    %1 = tpu.iota {dimensions = array<i32: 1>} : vector<1x128xi32>
    %c0_1 = arith.constant 0 : index
    %c0_2 = arith.constant 0 : index
    %2 = vector.load %arg2[%c0_1, %c0_2] : memref<25x128xf32, #tpu.memory_space<vmem>>, vector<25x128xf32>
    %cst = arith.constant dense<0.000000e+00> : vector<16x128xf32>
    %3 = tpu.matmul %0, %2, %cst {dimension_numbers = #tpu.dot_dimension_numbers<[1], [0], [0], [1], [0, 0, 1, 1], [], []>} : vector<16x25xf32>, vector<25x128xf32>, vector<16x128xf32> -> vector<16x128xf32>
    %c0_3 = arith.constant 0 : index
    %c0_4 = arith.constant 0 : index
    %4 = vector.load %arg5[%c0_3, %c0_4] : memref<9x128xf32, #tpu.memory_space<vmem>>, vector<1x128xf32>
    %5 = vector.broadcast %4 : vector<1x128xf32> to vector<16x128xf32>
    %6 = arith.addf %3, %5 : vector<16x128xf32>
    %c1 = arith.constant 1 : index
    %c0_5 = arith.constant 0 : index
    %7 = vector.load %arg5[%c1, %c0_5] : memref<9x128xf32, #tpu.memory_space<vmem>>, vector<1x128xf32>
    %c2 = arith.constant 2 : index
    %c0_6 = arith.constant 0 : index
    %8 = vector.load %arg5[%c2, %c0_6] : memref<9x128xf32, #tpu.memory_space<vmem>>, vector<1x128xf32>
    %c32_i32 = arith.constant 32 : i32
    %9 = vector.broadcast %c32_i32 : i32 to vector<1x128xi32>
    %10 = arith.cmpi slt, %1, %9 : vector<1x128xi32>
    %cst_7 = arith.constant dense<0.000000e+00> : vector<16xf32>
    %11 = vector.multi_reduction <add>, %6, %cst_7 [1] : vector<16x128xf32> to vector<16xf32>
    %12 = vector.shape_cast %11 : vector<16xf32> to vector<16x1xf32>
    %cst_8 = arith.constant 3.125000e-02 : f32
    %13 = vector.broadcast %cst_8 : f32 to vector<16x1xf32>
    %14 = arith.mulf %12, %13 : vector<16x1xf32>
    %15 = vector.broadcast %14 : vector<16x1xf32> to vector<16x128xf32>
    %16 = arith.subf %6, %15 : vector<16x128xf32>
    %cst_9 = arith.constant 0.000000e+00 : f32
    %17 = vector.shape_cast %10 : vector<1x128xi1> to vector<1x128xi1>
    %18 = vector.broadcast %17 : vector<1x128xi1> to vector<16x128xi1>
    %19 = vector.broadcast %cst_9 : f32 to vector<16x128xf32>
    %20 = arith.select %18, %16, %19 : vector<16x128xi1>, vector<16x128xf32>
    %21 = arith.mulf %20, %20 : vector<16x128xf32>
    %cst_10 = arith.constant dense<0.000000e+00> : vector<16xf32>
    %22 = vector.multi_reduction <add>, %21, %cst_10 [1] : vector<16x128xf32> to vector<16xf32>
    %23 = vector.shape_cast %22 : vector<16xf32> to vector<16x1xf32>
    %cst_11 = arith.constant 3.125000e-02 : f32
    %24 = vector.broadcast %cst_11 : f32 to vector<16x1xf32>
    %25 = arith.mulf %23, %24 : vector<16x1xf32>
    %cst_12 = arith.constant 9.99999974E-6 : f32
    %26 = vector.broadcast %cst_12 : f32 to vector<16x1xf32>
    %27 = arith.addf %25, %26 : vector<16x1xf32>
    %28 = math.rsqrt %27 : vector<16x1xf32>
    %29 = vector.broadcast %28 : vector<16x1xf32> to vector<16x128xf32>
    %30 = arith.mulf %20, %29 : vector<16x128xf32>
    %31 = vector.broadcast %7 : vector<1x128xf32> to vector<16x128xf32>
    %32 = arith.mulf %30, %31 : vector<16x128xf32>
    %33 = vector.broadcast %8 : vector<1x128xf32> to vector<16x128xf32>
    %34 = arith.addf %32, %33 : vector<16x128xf32>
    %cst_13 = arith.constant 0.000000e+00 : f32
    %35 = vector.broadcast %cst_13 : f32 to vector<16x128xf32>
    %36 = arith.maximumf %34, %35 : vector<16x128xf32>
    %c0_14 = arith.constant 0 : index
    %c0_15 = arith.constant 0 : index
    %c0_16 = arith.constant 0 : index
    %37 = vector.load %arg3[%c0_14, %c0_15, %c0_16] : memref<2x128x128xf32, #tpu.memory_space<vmem>>, vector<1x128x128xf32>
    %38 = vector.shape_cast %37 : vector<1x128x128xf32> to vector<128x128xf32>
    %cst_17 = arith.constant dense<0.000000e+00> : vector<16x128xf32>
    %39 = tpu.matmul %36, %38, %cst_17 {dimension_numbers = #tpu.dot_dimension_numbers<[1], [0], [0], [1], [0, 0, 1, 1], [], []>} : vector<16x128xf32>, vector<128x128xf32>, vector<16x128xf32> -> vector<16x128xf32>
    %c3 = arith.constant 3 : index
    %c0_18 = arith.constant 0 : index
    %40 = vector.load %arg5[%c3, %c0_18] : memref<9x128xf32, #tpu.memory_space<vmem>>, vector<1x128xf32>
    %41 = vector.broadcast %40 : vector<1x128xf32> to vector<16x128xf32>
    %42 = arith.addf %39, %41 : vector<16x128xf32>
    %c4 = arith.constant 4 : index
    %c0_19 = arith.constant 0 : index
    %43 = vector.load %arg5[%c4, %c0_19] : memref<9x128xf32, #tpu.memory_space<vmem>>, vector<1x128xf32>
    %c5 = arith.constant 5 : index
    %c0_20 = arith.constant 0 : index
    %44 = vector.load %arg5[%c5, %c0_20] : memref<9x128xf32, #tpu.memory_space<vmem>>, vector<1x128xf32>
    %c32_i32_21 = arith.constant 32 : i32
    %45 = vector.broadcast %c32_i32_21 : i32 to vector<1x128xi32>
    %46 = arith.cmpi slt, %1, %45 : vector<1x128xi32>
    %cst_22 = arith.constant dense<0.000000e+00> : vector<16xf32>
    %47 = vector.multi_reduction <add>, %42, %cst_22 [1] : vector<16x128xf32> to vector<16xf32>
    %48 = vector.shape_cast %47 : vector<16xf32> to vector<16x1xf32>
    %cst_23 = arith.constant 3.125000e-02 : f32
    %49 = vector.broadcast %cst_23 : f32 to vector<16x1xf32>
    %50 = arith.mulf %48, %49 : vector<16x1xf32>
    %51 = vector.broadcast %50 : vector<16x1xf32> to vector<16x128xf32>
    %52 = arith.subf %42, %51 : vector<16x128xf32>
    %cst_24 = arith.constant 0.000000e+00 : f32
    %53 = vector.shape_cast %46 : vector<1x128xi1> to vector<1x128xi1>
    %54 = vector.broadcast %53 : vector<1x128xi1> to vector<16x128xi1>
    %55 = vector.broadcast %cst_24 : f32 to vector<16x128xf32>
    %56 = arith.select %54, %52, %55 : vector<16x128xi1>, vector<16x128xf32>
    %57 = arith.mulf %56, %56 : vector<16x128xf32>
    %cst_25 = arith.constant dense<0.000000e+00> : vector<16xf32>
    %58 = vector.multi_reduction <add>, %57, %cst_25 [1] : vector<16x128xf32> to vector<16xf32>
    %59 = vector.shape_cast %58 : vector<16xf32> to vector<16x1xf32>
    %cst_26 = arith.constant 3.125000e-02 : f32
    %60 = vector.broadcast %cst_26 : f32 to vector<16x1xf32>
    %61 = arith.mulf %59, %60 : vector<16x1xf32>
    %cst_27 = arith.constant 9.99999974E-6 : f32
    %62 = vector.broadcast %cst_27 : f32 to vector<16x1xf32>
    %63 = arith.addf %61, %62 : vector<16x1xf32>
    %64 = math.rsqrt %63 : vector<16x1xf32>
    %65 = vector.broadcast %64 : vector<16x1xf32> to vector<16x128xf32>
    %66 = arith.mulf %56, %65 : vector<16x128xf32>
    %67 = vector.broadcast %43 : vector<1x128xf32> to vector<16x128xf32>
    %68 = arith.mulf %66, %67 : vector<16x128xf32>
    %69 = vector.broadcast %44 : vector<1x128xf32> to vector<16x128xf32>
    %70 = arith.addf %68, %69 : vector<16x128xf32>
    %cst_28 = arith.constant 0.000000e+00 : f32
    %71 = vector.broadcast %cst_28 : f32 to vector<16x128xf32>
    %72 = arith.maximumf %70, %71 : vector<16x128xf32>
    %c1_29 = arith.constant 1 : index
    %c0_30 = arith.constant 0 : index
    %c0_31 = arith.constant 0 : index
    %73 = vector.load %arg3[%c1_29, %c0_30, %c0_31] : memref<2x128x128xf32, #tpu.memory_space<vmem>>, vector<1x128x128xf32>
    %74 = vector.shape_cast %73 : vector<1x128x128xf32> to vector<128x128xf32>
    %cst_32 = arith.constant dense<0.000000e+00> : vector<16x128xf32>
    %75 = tpu.matmul %72, %74, %cst_32 {dimension_numbers = #tpu.dot_dimension_numbers<[1], [0], [0], [1], [0, 0, 1, 1], [], []>} : vector<16x128xf32>, vector<128x128xf32>, vector<16x128xf32> -> vector<16x128xf32>
    %c6 = arith.constant 6 : index
    %c0_33 = arith.constant 0 : index
    %76 = vector.load %arg5[%c6, %c0_33] : memref<9x128xf32, #tpu.memory_space<vmem>>, vector<1x128xf32>
    %77 = vector.broadcast %76 : vector<1x128xf32> to vector<16x128xf32>
    %78 = arith.addf %75, %77 : vector<16x128xf32>
    %c7 = arith.constant 7 : index
    %c0_34 = arith.constant 0 : index
    %79 = vector.load %arg5[%c7, %c0_34] : memref<9x128xf32, #tpu.memory_space<vmem>>, vector<1x128xf32>
    %c8 = arith.constant 8 : index
    %c0_35 = arith.constant 0 : index
    %80 = vector.load %arg5[%c8, %c0_35] : memref<9x128xf32, #tpu.memory_space<vmem>>, vector<1x128xf32>
    %c32_i32_36 = arith.constant 32 : i32
    %81 = vector.broadcast %c32_i32_36 : i32 to vector<1x128xi32>
    %82 = arith.cmpi slt, %1, %81 : vector<1x128xi32>
    %cst_37 = arith.constant dense<0.000000e+00> : vector<16xf32>
    %83 = vector.multi_reduction <add>, %78, %cst_37 [1] : vector<16x128xf32> to vector<16xf32>
    %84 = vector.shape_cast %83 : vector<16xf32> to vector<16x1xf32>
    %cst_38 = arith.constant 3.125000e-02 : f32
    %85 = vector.broadcast %cst_38 : f32 to vector<16x1xf32>
    %86 = arith.mulf %84, %85 : vector<16x1xf32>
    %87 = vector.broadcast %86 : vector<16x1xf32> to vector<16x128xf32>
    %88 = arith.subf %78, %87 : vector<16x128xf32>
    %cst_39 = arith.constant 0.000000e+00 : f32
    %89 = vector.shape_cast %82 : vector<1x128xi1> to vector<1x128xi1>
    %90 = vector.broadcast %89 : vector<1x128xi1> to vector<16x128xi1>
    %91 = vector.broadcast %cst_39 : f32 to vector<16x128xf32>
    %92 = arith.select %90, %88, %91 : vector<16x128xi1>, vector<16x128xf32>
    %93 = arith.mulf %92, %92 : vector<16x128xf32>
    %cst_40 = arith.constant dense<0.000000e+00> : vector<16xf32>
    %94 = vector.multi_reduction <add>, %93, %cst_40 [1] : vector<16x128xf32> to vector<16xf32>
    %95 = vector.shape_cast %94 : vector<16xf32> to vector<16x1xf32>
    %cst_41 = arith.constant 3.125000e-02 : f32
    %96 = vector.broadcast %cst_41 : f32 to vector<16x1xf32>
    %97 = arith.mulf %95, %96 : vector<16x1xf32>
    %cst_42 = arith.constant 9.99999974E-6 : f32
    %98 = vector.broadcast %cst_42 : f32 to vector<16x1xf32>
    %99 = arith.addf %97, %98 : vector<16x1xf32>
    %100 = math.rsqrt %99 : vector<16x1xf32>
    %101 = vector.broadcast %100 : vector<16x1xf32> to vector<16x128xf32>
    %102 = arith.mulf %92, %101 : vector<16x128xf32>
    %103 = vector.broadcast %79 : vector<1x128xf32> to vector<16x128xf32>
    %104 = arith.mulf %102, %103 : vector<16x128xf32>
    %105 = vector.broadcast %80 : vector<1x128xf32> to vector<16x128xf32>
    %106 = arith.addf %104, %105 : vector<16x128xf32>
    %cst_43 = arith.constant 0.000000e+00 : f32
    %107 = vector.broadcast %cst_43 : f32 to vector<16x128xf32>
    %108 = arith.maximumf %106, %107 : vector<16x128xf32>
    %c0_44 = arith.constant 0 : index
    %c0_45 = arith.constant 0 : index
    %109 = vector.load %arg4[%c0_44, %c0_45] : memref<128x128xf32, #tpu.memory_space<vmem>>, vector<128x128xf32>
    %cst_46 = arith.constant dense<0.000000e+00> : vector<16x128xf32>
    %110 = tpu.matmul %108, %109, %cst_46 {dimension_numbers = #tpu.dot_dimension_numbers<[1], [0], [0], [1], [0, 0, 1, 1], [], []>} : vector<16x128xf32>, vector<128x128xf32>, vector<16x128xf32> -> vector<16x128xf32>
    %c0_47 = arith.constant 0 : index
    %c0_48 = arith.constant 0 : index
    %111 = vector.load %arg6[%c0_47, %c0_48] : memref<1x128xf32, #tpu.memory_space<vmem>>, vector<1x128xf32>
    %112 = vector.broadcast %111 : vector<1x128xf32> to vector<16x128xf32>
    %113 = arith.addf %110, %112 : vector<16x128xf32>
    %114 = tpu.iota {dimensions = array<i32: 1>} : vector<1x128xi32>
    %c4_i32 = arith.constant 4 : i32
    %115 = vector.broadcast %c4_i32 : i32 to vector<1x128xi32>
    %116 = arith.cmpi slt, %114, %115 : vector<1x128xi32>
    %cst_49 = arith.constant -1.000000e+30 : f32
    %117 = vector.shape_cast %116 : vector<1x128xi1> to vector<1x128xi1>
    %118 = vector.broadcast %117 : vector<1x128xi1> to vector<16x128xi1>
    %119 = vector.broadcast %cst_49 : f32 to vector<16x128xf32>
    %120 = arith.select %118, %113, %119 : vector<16x128xi1>, vector<16x128xf32>
    %cst_50 = arith.constant dense<0xFF800000> : vector<16xf32>
    %121 = vector.multi_reduction <maximumf>, %120, %cst_50 [1] : vector<16x128xf32> to vector<16xf32>
    %122 = vector.shape_cast %121 : vector<16xf32> to vector<16x1xf32>
    %123 = vector.broadcast %122 : vector<16x1xf32> to vector<16x128xf32>
    %124 = arith.subf %120, %123 : vector<16x128xf32>
    %125 = math.exp %124 : vector<16x128xf32>
    %cst_51 = arith.constant dense<0.000000e+00> : vector<16xf32>
    %126 = vector.multi_reduction <add>, %125, %cst_51 [1] : vector<16x128xf32> to vector<16xf32>
    %127 = vector.shape_cast %126 : vector<16xf32> to vector<16x1xf32>
    %128 = vector.broadcast %127 : vector<16x1xf32> to vector<16x128xf32>
    %129 = arith.divf %125, %128 : vector<16x128xf32>
    %c0_52 = arith.constant 0 : index
    %c0_53 = arith.constant 0 : index
    %130 = vector.load %arg7[%c0_52, %c0_53] : memref<16x128xf32, #tpu.memory_space<vmem>>, vector<16x128xf32>
    tpu.vector_store %arg7[%c0_52, %c0_53], %129 {strides = array<i32>} : memref<16x128xf32, #tpu.memory_space<vmem>>, vector<16x128xf32>,
    return
  }
  func.func @transform_0(%arg0: i32) -> (i32, i32) {
    %c0_i32 = arith.constant 0 : i32
    %c0_i32_0 = arith.constant 0 : i32
    return %arg0, %c0_i32 : i32, i32
  }
  func.func @transform_1(%arg0: i32) -> (i32, i32) {
    %c0_i32 = arith.constant 0 : i32
    %c0_i32_0 = arith.constant 0 : i32
    %c0_i32_1 = arith.constant 0 : i32
    return %c0_i32, %c0_i32_0 : i32, i32
  }
  func.func @transform_2(%arg0: i32) -> (i32, i32, i32) {
    %c0_i32 = arith.constant 0 : i32
    %c0_i32_0 = arith.constant 0 : i32
    %c0_i32_1 = arith.constant 0 : i32
    %c0_i32_2 = arith.constant 0 : i32
    return %c0_i32, %c0_i32_0, %c0_i32_1 : i32, i32, i32
  }
  func.func @transform_3(%arg0: i32) -> (i32, i32) {
    %c0_i32 = arith.constant 0 : i32
    %c0_i32_0 = arith.constant 0 : i32
    %c0_i32_1 = arith.constant 0 : i32
    return %c0_i32, %c0_i32_0 : i32, i32
  }
  func.func @transform_4(%arg0: i32) -> (i32, i32) {
    %c0_i32 = arith.constant 0 : i32
    %c0_i32_0 = arith.constant 0 : i32
    %c0_i32_1 = arith.constant 0 : i32
    return %c0_i32, %c0_i32_0 : i32, i32
  }
  func.func @transform_5(%arg0: i32) -> (i32, i32) {
    %c0_i32 = arith.constant 0 : i32
    %c0_i32_0 = arith.constant 0 : i32
    %c0_i32_1 = arith.constant 0 : i32
    return %c0_i32, %c0_i32_0 : i32, i32
  }
  func.func @transform_6(%arg0: i32) -> (i32, i32) {
    %c0_i32 = arith.constant 0 : i32
    %c0_i32_0 = arith.constant 0 : i32
    return %arg0, %c0_i32 : i32, i32
  }
}

</mosaic_0001>

<llo_original>
// kernel: tpu_custom_call.1
$region0: #{tpu_custom_call.1}
  #allocation0 [shape = 'u32[]', space=smem, size = 0x4, offset = 0x4, fixed_abs, tag = 'smem constant byte address 0x4 - core index']
  #allocation1 [shape = 'u32[144,128]{1,0:T(1,128)}', space=vmem, size = 0x12000, scoped, tag = 'internal scratch']
  %s0 = inlined_call_operand.hbm [shape: f32[16,25], index: 0, kind: input, shape index: {}]
  %s1 = inlined_call_operand.hbm [shape: f32[25,128], index: 1, kind: input, shape index: {}]
  %s2 = inlined_call_operand.hbm [shape: f32[2,128,128], index: 2, kind: input, shape index: {}]
  %s3 = inlined_call_operand.hbm [shape: f32[128,128], index: 3, kind: input, shape index: {}]
  %s4 = inlined_call_operand.hbm [shape: f32[9,128], index: 4, kind: input, shape index: {}]
  %s5 = inlined_call_operand.vmem [shape: f32[1,128], index: 5, kind: input, shape index: {}]
  %s6 = inlined_call_operand.hbm [shape: f32[16,128], index: 6, kind: output, shape index: {}]
  %s7 = sld [smem:[#allocation0]]
  $region54: #{tpu_custom_call.1} parent=0
    _
  %s9 = ssub.s32 1, %s7
  %s10 = scalar_select 0, %s9, %s7
  $region1: #{tpu_custom_call.1} parent=0
    #allocation2 [shape = 'u8[8192]{0}', space=vmem, size = 0x2000, scoped, tag = 'input window, operand 0, single buffered']
    #allocation3 [shape = 's32[1]{0}', space=sflag, size = 0x4, scoped, tag = 'scoped memory for tpu_custom_call.1']
    #allocation4 [shape = 's32[1]{0}', space=sflag, size = 0x4, scoped, tag = 'scoped memory for tpu_custom_call.1']
    #allocation5 [shape = 'u8[16384]{0}', space=vmem, size = 0x4000, scoped, tag = 'input window, operand 1, single buffered']
    #allocation6 [shape = 's32[1]{0}', space=sflag, size = 0x4, scoped, tag = 'scoped memory for tpu_custom_call.1']
    #allocation7 [shape = 'u8[131072]{0}', space=vmem, size = 0x20000, scoped, tag = 'input window, operand 2, single buffered']
    #allocation8 [shape = 'u8[65536]{0}', space=vmem, size = 0x10000, scoped, tag = 'input window, operand 3, single buffered']
    #allocation9 [shape = 's32[1]{0}', space=sflag, size = 0x4, scoped, tag = 'scoped memory for tpu_custom_call.1']
    #allocation10 [shape = 'u8[8192]{0}', space=vmem, size = 0x2000, scoped, tag = 'input window, operand 4, single buffered']
    #allocation11 [shape = 'u8[8192]{0}', space=vmem, size = 0x2000, scoped, tag = 'output window, operand 0, single buffered']
    %11 = vsyncpa [#allocation3], 0
    %12 = vsyncpa [#allocation6], 0
    %13 = vsyncpa [#allocation9], 0
    %14 = vsyncpa [#allocation4], 0
    // Predicated region
    $region2: #{tpu_custom_call.1} parent=1 // pred_check
      _
    $region3: #{tpu_custom_call.1} parent=1 // pred_check_branch
      %16 = sbr.rel (0) target = $region5
    $region4: #{tpu_custom_call.1} parent=1 // pred_region
      %s18 = ssub.s32 256, 256
      %19 = vsyncadd [#allocation3], %s18
      %s20 = sshll.u32 [#allocation2], 4
      %s21 = int_to_ptr.vmem [resolvable:$true] %s20
      %26 = dma.hbm_to_vmem [thread:$0]  %s0, 256, %s21, [#allocation3], 128, 128, 8
    $region5: #{tpu_custom_call.1} parent=1 // pred_fallthru
      _
    // Predicated region
    $region6: #{tpu_custom_call.1} parent=1 // pred_check
      _
    $region7: #{tpu_custom_call.1} parent=1 // pred_check_branch
      %28 = sbr.rel (0) target = $region9
    $region8: #{tpu_custom_call.1} parent=1 // pred_region
      %s30 = ssub.s32 512, 512
      %31 = vsyncadd [#allocation6], %s30
      %s32 = sshll.u32 [#allocation5], 4
      %s33 = int_to_ptr.vmem [resolvable:$true] %s32
      %38 = dma.hbm_to_vmem [thread:$0]  %s1, 512, %s33, [#allocation6], 128, 128, 8
    $region9: #{tpu_custom_call.1} parent=1 // pred_fallthru
      _
    // Predicated region
    $region10: #{tpu_custom_call.1} parent=1 // pred_check
      _
    $region11: #{tpu_custom_call.1} parent=1 // pred_check_branch
      %40 = sbr.rel (0) target = $region13
    $region12: #{tpu_custom_call.1} parent=1 // pred_region
      %s42 = ssub.s32 4096, 4096
      %43 = vsyncadd [#allocation6], %s42
      %s44 = sshll.u32 [#allocation7], 4
      %s45 = int_to_ptr.vmem [resolvable:$true] %s44
      %50 = dma.hbm_to_vmem [thread:$0]  %s2, 4096, %s45, [#allocation6], 128, 128, 8
    $region13: #{tpu_custom_call.1} parent=1 // pred_fallthru
      _
    // Predicated region
    $region14: #{tpu_custom_call.1} parent=1 // pred_check
      _
    $region15: #{tpu_custom_call.1} parent=1 // pred_check_branch
      %52 = sbr.rel (0) target = $region17
    $region16: #{tpu_custom_call.1} parent=1 // pred_region
      %s54 = ssub.s32 2048, 2048
      %55 = vsyncadd [#allocation9], %s54
      %s56 = sshll.u32 [#allocation8], 4
      %s57 = int_to_ptr.vmem [resolvable:$true] %s56
      %62 = dma.hbm_to_vmem [thread:$0]  %s3, 2048, %s57, [#allocation9], 128, 128, 8
    $region17: #{tpu_custom_call.1} parent=1 // pred_fallthru
      _
    // Predicated region
    $region18: #{tpu_custom_call.1} parent=1 // pred_check
      _
    $region19: #{tpu_custom_call.1} parent=1 // pred_check_branch
      %64 = sbr.rel (0) target = $region21
    $region20: #{tpu_custom_call.1} parent=1 // pred_region
      %s66 = ssub.s32 256, 256
      %67 = vsyncadd [#allocation9], %s66
      %s68 = sshll.u32 [#allocation10], 4
      %s69 = int_to_ptr.vmem [resolvable:$true] %s68
      %74 = dma.hbm_to_vmem [thread:$0]  %s4, 256, %s69, [#allocation9], 128, 128, 8
    $region21: #{tpu_custom_call.1} parent=1 // pred_fallthru
      _
    // Predicated region
    $region22: #{tpu_custom_call.1} parent=1 // pred_check
      _
    $region23: #{tpu_custom_call.1} parent=1 // pred_check_branch
      %76 = sbr.rel (0) target = $region25
    $region24: #{tpu_custom_call.1} parent=1 // pred_region
      _
    $region25: #{tpu_custom_call.1} parent=1 // pred_fallthru
      _
    // Predicated region
    $region26: #{tpu_custom_call.1} parent=1 // pred_check
      _
    $region27: #{tpu_custom_call.1} parent=1 // pred_check_branch
      %78 = sbr.rel (0) target = $region29
    $region28: #{tpu_custom_call.1} parent=1 // pred_region
      %79 = dma.done [#allocation3], 256
    $region29: #{tpu_custom_call.1} parent=1 // pred_fallthru
      _
    // Predicated region
    $region30: #{tpu_custom_call.1} parent=1 // pred_check
      _
    $region31: #{tpu_custom_call.1} parent=1 // pred_check_branch
      %81 = sbr.rel (0) target = $region33
    $region32: #{tpu_custom_call.1} parent=1 // pred_region
      %82 = dma.done [#allocation6], 512
    $region33: #{tpu_custom_call.1} parent=1 // pred_fallthru
      _
    // Predicated region
    $region34: #{tpu_custom_call.1} parent=1 // pred_check
      _
    $region35: #{tpu_custom_call.1} parent=1 // pred_check_branch
      %84 = sbr.rel (0) target = $region37
    $region36: #{tpu_custom_call.1} parent=1 // pred_region
      %85 = dma.done [#allocation6], 4096
    $region37: #{tpu_custom_call.1} parent=1 // pred_fallthru
      _
    // Predicated region
    $region38: #{tpu_custom_call.1} parent=1 // pred_check
      _
    $region39: #{tpu_custom_call.1} parent=1 // pred_check_branch
      %87 = sbr.rel (0) target = $region41
    $region40: #{tpu_custom_call.1} parent=1 // pred_region
      %88 = dma.done [#allocation9], 2048
    $region41: #{tpu_custom_call.1} parent=1 // pred_fallthru
      _
    // Predicated region
    $region42: #{tpu_custom_call.1} parent=1 // pred_check
      _
    $region43: #{tpu_custom_call.1} parent=1 // pred_check_branch
      %90 = sbr.rel (0) target = $region45
    $region44: #{tpu_custom_call.1} parent=1 // pred_region
      %91 = dma.done [#allocation9], 256
    $region45: #{tpu_custom_call.1} parent=1 // pred_fallthru
      _
    %v92 = vld [vmem:[#allocation2] sm:$0xff]
    %v93 = vld [vmem:[#allocation2 + $0x8] sm:$0xff]
    %v94 = vlaneseq
    %v95 = vand.u32 %v94, 127
    %v96 = vld [vmem:[#allocation5] sm:$0xff]
    %v97 = vld [vmem:[#allocation5 + $0x8] sm:$0xff]
    %v98 = vld [vmem:[#allocation5 + $0x10] sm:$0xff]
    %v99 = vld [vmem:[#allocation5 + $0x18] sm:$0x1]
    %v100 = vld [vmem:[#allocation10] sm:$0x1]
    %v101 = vlaneseq
    %v102 = vshrl.u32 %v101, 7
    %v103 = vsub.s32 0, %v102
    %v104 = vrot.slane %v100, %v103
    %vm105 = vcmask 203776
    %v107 = vsel %vm105, %v92, 0
    %v110 = vsel %vm105, %v93, 0
    %vm112 = vcmask 1040384
    %v114 = vsel %vm112, %v99, 0
    %116 = vmatprep.subr.mxu0 0.0
    %117 = vmatpush1.msra.mxu0 %v96
    %118 = vmatprep.subr.mxu0 0.0
    %119 = vmatpush1.msra.mxu0 %v97
    %120 = vmatprep.subr.mxu0 0.0
    %121 = vmatpush1.msra.mxu0 %v98
    %122 = vmatprep.subr.mxu0 0.0
    %123 = vmatpush1.msra.mxu0 %v114
    %124 = vmatprep.subr.mxu0 0.0
    %125 = vmatpush1.msra.mxu0 0.0
    %126 = vmatprep.subr.mxu0 0.0
    %127 = vmatpush1.msra.mxu0 0.0
    %128 = vmatprep.subr.mxu0 0.0
    %129 = vmatpush1.msra.mxu0 0.0
    %130 = vmatprep.subr.mxu0 0.0
    %131 = vmatpush1.msra.mxu0 0.0
    %132 = vmatprep.subr.mxu0 0.0
    %133 = vmatpush1.msra.mxu0 0.0
    %134 = vmatprep.subr.mxu0 0.0
    %135 = vmatpush1.msra.mxu0 0.0
    %136 = vmatprep.subr.mxu0 0.0
    %137 = vmatpush1.msra.mxu0 0.0
    %138 = vmatprep.subr.mxu0 0.0
    %139 = vmatpush1.msra.mxu0 0.0
    %140 = vmatprep.subr.mxu0 0.0
    %141 = vmatpush1.msra.mxu0 0.0
    %142 = vmatprep.subr.mxu0 0.0
    %143 = vmatpush1.msra.mxu0 0.0
    %144 = vmatprep.subr.mxu0 0.0
    %145 = vmatpush1.msra.mxu0 0.0
    %146 = vmatprep.subr.mxu0 0.0
    %147 = vmatpush1.msra.mxu0 0.0
    %148 = vmatprep.subr.mxu0 0.0
    %149 = vmatpush1.msra.mxu0 0.0
    %150 = vmatprep.subr.mxu0 0.0
    %151 = vmatpush1.msra.mxu0 0.0
    %152 = vmatprep.subr.mxu0 0.0
    %153 = vmatpush1.msra.mxu0 0.0
    %154 = vmatprep.subr.mxu0 0.0
    %155 = vmatpush1.msra.mxu0 0.0
    %156 = vmatprep.subr.mxu0 0.0
    %157 = vmatpush1.msra.mxu0 0.0
    %158 = vmatprep.subr.mxu0 0.0
    %159 = vmatpush1.msra.mxu0 0.0
    %160 = vmatprep.subr.mxu0 0.0
    %161 = vmatpush1.msra.mxu0 0.0
    %162 = vmatprep.subr.mxu0 0.0
    %163 = vmatpush1.msra.mxu0 0.0
    %164 = vmatprep.subr.mxu0 0.0
    %165 = vmatpush1.msra.mxu0 0.0
    %166 = vmatprep.subr.mxu0 0.0
    %167 = vmatpush1.msra.mxu0 0.0
    %168 = vmatprep.subr.mxu0 0.0
    %169 = vmatpush1.msra.mxu0 0.0
    %170 = vmatprep.subr.mxu0 0.0
    %171 = vmatpush1.msra.mxu0 0.0
    %172 = vmatprep.subr.mxu0 0.0
    %173 = vmatpush1.msra.mxu0 0.0
    %174 = vmatprep.subr.mxu0 0.0
    %175 = vmatpush1.msra.mxu0 0.0
    %176 = vmatprep.subr.mxu0 0.0
    %177 = vmatpush1.msra.mxu0 0.0
    %178 = vmatprep.subr.mxu0 0.0
    %179 = vmatpush1.msra.mxu0 0.0
    %180 = vmatprep.mubr.f32.mxu0 0.0
    %181 = vmatmul.mubr.f32.gmra.mrb[0].mxu0 %v107
    %v182 = vpop.f32.mrb[0].mxu0
    %v183 = vadd.f32 %v104, %v182
    %v184 = vpop.f32.mrb[0].mxu0
    %185 = vmatprep.mubr.f32.mxu0 0.0
    %186 = vmatmul.mubr.f32.gmra.mrb[0].mxu0 %v110
    %v187 = vpop.f32.mrb[0].mxu0
    %v188 = vadd.f32 %v104, %v187
    %v189 = vpop.f32.mrb[0].mxu0
    %190 = vdwg.mxu0
    %v191 = vld [vmem:[#allocation10 + $0x1] sm:$0x1]
    %v192 = vld [vmem:[#allocation10 + $0x2] sm:$0x1]
    %vm193 = vcmp.lt.s32.totalorder %v95, 32
    %194 = vadd.xlane.f32.xlu0 %v183
    %v195 = vpop.xlane.xlu0 %194
    %196 = vadd.xlane.f32.xlu0 %v188
    %v197 = vpop.xlane.xlu0 %196
    %v198 = vmul.f32 %v195, 0.03125
    %v199 = vmul.f32 %v197, 0.03125
    %v200 = vsub.f32 %v183, %v198
    %v201 = vsub.f32 %v188, %v199
    %v202 = vsel %vm193, 1, 0
    %vm203 = vcmp.eq.s32.totalorder %v202, 1
    %v204 = vsel %vm203, %v200, 0.0
    %v205 = vsel %vm203, %v201, 0.0
    %v206 = vmul.f32 %v204, %v204
    %v207 = vmul.f32 %v205, %v205
    %208 = vadd.xlane.f32.xlu0 %v206
    %v209 = vpop.xlane.xlu0 %208
    %210 = vadd.xlane.f32.xlu0 %v207
    %v211 = vpop.xlane.xlu0 %210
    %v212 = vmul.f32 %v209, 0.03125
    %v213 = vmul.f32 %v211, 0.03125
    %v214 = vadd.f32 %v212, 1e-05
    %v215 = vadd.f32 %v213, 1e-05
    %v216 = vrsqrt.pop %v214
    %v217 = vrsqrt.pop %v215
    %v218 = vmul.f32 %v204, %v216
    %v219 = vmul.f32 %v205, %v217
    %v220 = vlaneseq
    %v221 = vshrl.u32 %v220, 7
    %v222 = vsub.s32 0, %v221
    %v223 = vrot.slane %v191, %v222
    %v224 = vmul.f32 %v218, %v223
    %v225 = vmul.f32 %v219, %v223
    %v226 = vlaneseq
    %v227 = vshrl.u32 %v226, 7
    %v228 = vsub.s32 0, %v227
    %v229 = vrot.slane %v192, %v228
    %v230 = vadd.f32 %v224, %v229
    %v231 = vadd.f32 %v225, %v229
    %v232 = vmax.f32 %v230, 0.0
    %v233 = vmax.f32 %v231, 0.0
    %v234 = vld [vmem:[#allocation7] sm:$0xff]
    %v235 = vld [vmem:[#allocation7 + $0x8] sm:$0xff]
    %v236 = vld [vmem:[#allocation7 + $0x10] sm:$0xff]
    %v237 = vld [vmem:[#allocation7 + $0x18] sm:$0xff]
    %v238 = vld [vmem:[#allocation7 + $0x20] sm:$0xff]
    %v239 = vld [vmem:[#allocation7 + $0x28] sm:$0xff]
    %v240 = vld [vmem:[#allocation7 + $0x30] sm:$0xff]
    %v241 = vld [vmem:[#allocation7 + $0x38] sm:$0xff]
    %v242 = vld [vmem:[#allocation7 + $0x40] sm:$0xff]
    %v243 = vld [vmem:[#allocation7 + $0x48] sm:$0xff]
    %v244 = vld [vmem:[#allocation7 + $0x50] sm:$0xff]
    %v245 = vld [vmem:[#allocation7 + $0x58] sm:$0xff]
    %v246 = vld [vmem:[#allocation7 + $0x60] sm:$0xff]
    %v247 = vld [vmem:[#allocation7 + $0x68] sm:$0xff]
    %v248 = vld [vmem:[#allocation7 + $0x70] sm:$0xff]
    %v249 = vld [vmem:[#allocation7 + $0x78] sm:$0xff]
    %v250 = vld [vmem:[#allocation10 + $0x3] sm:$0x1]
    %v251 = vlaneseq
    %v252 = vshrl.u32 %v251, 7
    %v253 = vsub.s32 0, %v252
    %v254 = vrot.slane %v250, %v253
    %255 = vmatprep.subr.mxu0 0.0
    %256 = vmatpush1.msra.mxu0 %v234
    %257 = vmatprep.subr.mxu0 0.0
    %258 = vmatpush1.msra.mxu0 %v235
    %259 = vmatprep.subr.mxu0 0.0
    %260 = vmatpush1.msra.mxu0 %v236
    %261 = vmatprep.subr.mxu0 0.0
    %262 = vmatpush1.msra.mxu0 %v237
    %263 = vmatprep.subr.mxu0 0.0
    %264 = vmatpush1.msra.mxu0 %v238
    %265 = vmatprep.subr.mxu0 0.0
    %266 = vmatpush1.msra.mxu0 %v239
    %267 = vmatprep.subr.mxu0 0.0
    %268 = vmatpush1.msra.mxu0 %v240
    %269 = vmatprep.subr.mxu0 0.0
    %270 = vmatpush1.msra.mxu0 %v241
    %271 = vmatprep.subr.mxu0 0.0
    %272 = vmatpush1.msra.mxu0 %v242
    %273 = vmatprep.subr.mxu0 0.0
    %274 = vmatpush1.msra.mxu0 %v243
    %275 = vmatprep.subr.mxu0 0.0
    %276 = vmatpush1.msra.mxu0 %v244
    %277 = vmatprep.subr.mxu0 0.0
    %278 = vmatpush1.msra.mxu0 %v245
    %279 = vmatprep.subr.mxu0 0.0
    %280 = vmatpush1.msra.mxu0 %v246
    %281 = vmatprep.subr.mxu0 0.0
    %282 = vmatpush1.msra.mxu0 %v247
    %283 = vmatprep.subr.mxu0 0.0
    %284 = vmatpush1.msra.mxu0 %v248
    %285 = vmatprep.subr.mxu0 0.0
    %286 = vmatpush1.msra.mxu0 %v249
    %287 = vmatprep.subr.mxu0 0.0
    %288 = vmatpush1.msra.mxu0 0.0
    %289 = vmatprep.subr.mxu0 0.0
    %290 = vmatpush1.msra.mxu0 0.0
    %291 = vmatprep.subr.mxu0 0.0
    %292 = vmatpush1.msra.mxu0 0.0
    %293 = vmatprep.subr.mxu0 0.0
    %294 = vmatpush1.msra.mxu0 0.0
    %295 = vmatprep.subr.mxu0 0.0
    %296 = vmatpush1.msra.mxu0 0.0
    %297 = vmatprep.subr.mxu0 0.0
    %298 = vmatpush1.msra.mxu0 0.0
    %299 = vmatprep.subr.mxu0 0.0
    %300 = vmatpush1.msra.mxu0 0.0
    %301 = vmatprep.subr.mxu0 0.0
    %302 = vmatpush1.msra.mxu0 0.0
    %303 = vmatprep.subr.mxu0 0.0
    %304 = vmatpush1.msra.mxu0 0.0
    %305 = vmatprep.subr.mxu0 0.0
    %306 = vmatpush1.msra.mxu0 0.0
    %307 = vmatprep.subr.mxu0 0.0
    %308 = vmatpush1.msra.mxu0 0.0
    %309 = vmatprep.subr.mxu0 0.0
    %310 = vmatpush1.msra.mxu0 0.0
    %311 = vmatprep.subr.mxu0 0.0
    %312 = vmatpush1.msra.mxu0 0.0
    %313 = vmatprep.subr.mxu0 0.0
    %314 = vmatpush1.msra.mxu0 0.0
    %315 = vmatprep.subr.mxu0 0.0
    %316 = vmatpush1.msra.mxu0 0.0
    %317 = vmatprep.subr.mxu0 0.0
    %318 = vmatpush1.msra.mxu0 0.0
    %319 = vmatprep.mubr.f32.mxu0 0.0
    %320 = vmatmul.mubr.f32.gmra.mrb[0].mxu0 %v232
    %v321 = vpop.f32.mrb[0].mxu0
    %v322 = vadd.f32 %v254, %v321
    %v323 = vpop.f32.mrb[0].mxu0
    %324 = vmatprep.mubr.f32.mxu0 0.0
    %325 = vmatmul.mubr.f32.gmra.mrb[0].mxu0 %v233
    %v326 = vpop.f32.mrb[0].mxu0
    %v327 = vadd.f32 %v254, %v326
    %v328 = vpop.f32.mrb[0].mxu0
    %329 = vdwg.mxu0
    %v330 = vld [vmem:[#allocation10 + $0x4] sm:$0x1]
    %v331 = vld [vmem:[#allocation10 + $0x5] sm:$0x1]
    %332 = vadd.xlane.f32.xlu0 %v322
    %v333 = vpop.xlane.xlu0 %332
    %334 = vadd.xlane.f32.xlu0 %v327
    %v335 = vpop.xlane.xlu0 %334
    %v336 = vmul.f32 %v333, 0.03125
    %v337 = vmul.f32 %v335, 0.03125
    %v338 = vsub.f32 %v322, %v336
    %v339 = vsub.f32 %v327, %v337
    %v340 = vsel %vm203, %v338, 0.0
    %v341 = vsel %vm203, %v339, 0.0
    %v342 = vmul.f32 %v340, %v340
    %v343 = vmul.f32 %v341, %v341
    %344 = vadd.xlane.f32.xlu0 %v342
    %v345 = vpop.xlane.xlu0 %344
    %346 = vadd.xlane.f32.xlu0 %v343
    %v347 = vpop.xlane.xlu0 %346
    %v348 = vmul.f32 %v345, 0.03125
    %v349 = vmul.f32 %v347, 0.03125
    %v350 = vadd.f32 %v348, 1e-05
    %v351 = vadd.f32 %v349, 1e-05
    %v352 = vrsqrt.pop %v350
    %v353 = vrsqrt.pop %v351
    %v354 = vmul.f32 %v340, %v352
    %v355 = vmul.f32 %v341, %v353
    %v356 = vlaneseq
    %v357 = vshrl.u32 %v356, 7
    %v358 = vsub.s32 0, %v357
    %v359 = vrot.slane %v330, %v358
    %v360 = vmul.f32 %v354, %v359
    %v361 = vmul.f32 %v355, %v359
    %v362 = vlaneseq
    %v363 = vshrl.u32 %v362, 7
    %v364 = vsub.s32 0, %v363
    %v365 = vrot.slane %v331, %v364
    %v366 = vadd.f32 %v360, %v365
    %v367 = vadd.f32 %v361, %v365
    %v368 = vmax.f32 %v366, 0.0
    %v369 = vmax.f32 %v367, 0.0
    %s370 = scalar_lea.vmem [#allocation7], 128
    %v371 = vld [vmem:[%s370] sm:$0xff]
    %v372 = vld [vmem:[%s370 + $0x8] sm:$0xff]
    %v373 = vld [vmem:[%s370 + $0x10] sm:$0xff]
    %v374 = vld [vmem:[%s370 + $0x18] sm:$0xff]
    %v375 = vld [vmem:[%s370 + $0x20] sm:$0xff]
    %v376 = vld [vmem:[%s370 + $0x28] sm:$0xff]
    %v377 = vld [vmem:[%s370 + $0x30] sm:$0xff]
    %v378 = vld [vmem:[%s370 + $0x38] sm:$0xff]
    %v379 = vld [vmem:[%s370 + $0x40] sm:$0xff]
    %v380 = vld [vmem:[%s370 + $0x48] sm:$0xff]
    %v381 = vld [vmem:[%s370 + $0x50] sm:$0xff]
    %v382 = vld [vmem:[%s370 + $0x58] sm:$0xff]
    %v383 = vld [vmem:[%s370 + $0x60] sm:$0xff]
    %v384 = vld [vmem:[%s370 + $0x68] sm:$0xff]
    %v385 = vld [vmem:[%s370 + $0x70] sm:$0xff]
    %v386 = vld [vmem:[%s370 + $0x78] sm:$0xff]
    %v387 = vld [vmem:[#allocation10 + $0x6] sm:$0x1]
    %v388 = vlaneseq
    %v389 = vshrl.u32 %v388, 7
    %v390 = vsub.s32 0, %v389
    %v391 = vrot.slane %v387, %v390
    %392 = vmatprep.subr.mxu0 0.0
    %393 = vmatpush1.msra.mxu0 %v371
    %394 = vmatprep.subr.mxu0 0.0
    %395 = vmatpush1.msra.mxu0 %v372
    %396 = vmatprep.subr.mxu0 0.0
    %397 = vmatpush1.msra.mxu0 %v373
    %398 = vmatprep.subr.mxu0 0.0
    %399 = vmatpush1.msra.mxu0 %v374
    %400 = vmatprep.subr.mxu0 0.0
    %401 = vmatpush1.msra.mxu0 %v375
    %402 = vmatprep.subr.mxu0 0.0
    %403 = vmatpush1.msra.mxu0 %v376
    %404 = vmatprep.subr.mxu0 0.0
    %405 = vmatpush1.msra.mxu0 %v377
    %406 = vmatprep.subr.mxu0 0.0
    %407 = vmatpush1.msra.mxu0 %v378
    %408 = vmatprep.subr.mxu0 0.0
    %409 = vmatpush1.msra.mxu0 %v379
    %410 = vmatprep.subr.mxu0 0.0
    %411 = vmatpush1.msra.mxu0 %v380
    %412 = vmatprep.subr.mxu0 0.0
    %413 = vmatpush1.msra.mxu0 %v381
    %414 = vmatprep.subr.mxu0 0.0
    %415 = vmatpush1.msra.mxu0 %v382
    %416 = vmatprep.subr.mxu0 0.0
    %417 = vmatpush1.msra.mxu0 %v383
    %418 = vmatprep.subr.mxu0 0.0
    %419 = vmatpush1.msra.mxu0 %v384
    %420 = vmatprep.subr.mxu0 0.0
    %421 = vmatpush1.msra.mxu0 %v385
    %422 = vmatprep.subr.mxu0 0.0
    %423 = vmatpush1.msra.mxu0 %v386
    %424 = vmatprep.subr.mxu0 0.0
    %425 = vmatpush1.msra.mxu0 0.0
    %426 = vmatprep.subr.mxu0 0.0
    %427 = vmatpush1.msra.mxu0 0.0
    %428 = vmatprep.subr.mxu0 0.0
    %429 = vmatpush1.msra.mxu0 0.0
    %430 = vmatprep.subr.mxu0 0.0
    %431 = vmatpush1.msra.mxu0 0.0
    %432 = vmatprep.subr.mxu0 0.0
    %433 = vmatpush1.msra.mxu0 0.0
    %434 = vmatprep.subr.mxu0 0.0
    %435 = vmatpush1.msra.mxu0 0.0
    %436 = vmatprep.subr.mxu0 0.0
    %437 = vmatpush1.msra.mxu0 0.0
    %438 = vmatprep.subr.mxu0 0.0
    %439 = vmatpush1.msra.mxu0 0.0
    %440 = vmatprep.subr.mxu0 0.0
    %441 = vmatpush1.msra.mxu0 0.0
    %442 = vmatprep.subr.mxu0 0.0
    %443 = vmatpush1.msra.mxu0 0.0
    %444 = vmatprep.subr.mxu0 0.0
    %445 = vmatpush1.msra.mxu0 0.0
    %446 = vmatprep.subr.mxu0 0.0
    %447 = vmatpush1.msra.mxu0 0.0
    %448 = vmatprep.subr.mxu0 0.0
    %449 = vmatpush1.msra.mxu0 0.0
    %450 = vmatprep.subr.mxu0 0.0
    %451 = vmatpush1.msra.mxu0 0.0
    %452 = vmatprep.subr.mxu0 0.0
    %453 = vmatpush1.msra.mxu0 0.0
    %454 = vmatprep.subr.mxu0 0.0
    %455 = vmatpush1.msra.mxu0 0.0
    %456 = vmatprep.mubr.f32.mxu0 0.0
    %457 = vmatmul.mubr.f32.gmra.mrb[0].mxu0 %v368
    %v458 = vpop.f32.mrb[0].mxu0
    %v459 = vadd.f32 %v391, %v458
    %v460 = vpop.f32.mrb[0].mxu0
    %461 = vmatprep.mubr.f32.mxu0 0.0
    %462 = vmatmul.mubr.f32.gmra.mrb[0].mxu0 %v369
    %v463 = vpop.f32.mrb[0].mxu0
    %v464 = vadd.f32 %v391, %v463
    %v465 = vpop.f32.mrb[0].mxu0
    %466 = vdwg.mxu0
    %v467 = vld [vmem:[#allocation10 + $0x7] sm:$0x1]
    %v468 = vld [vmem:[#allocation10 + $0x8] sm:$0x1]
    %469 = vadd.xlane.f32.xlu0 %v459
    %v470 = vpop.xlane.xlu0 %469
    %471 = vadd.xlane.f32.xlu0 %v464
    %v472 = vpop.xlane.xlu0 %471
    %v473 = vmul.f32 %v470, 0.03125
    %v474 = vmul.f32 %v472, 0.03125
    %v475 = vsub.f32 %v459, %v473
    %v476 = vsub.f32 %v464, %v474
    %v477 = vsel %vm203, %v475, 0.0
    %v478 = vsel %vm203, %v476, 0.0
    %v479 = vmul.f32 %v477, %v477
    %v480 = vmul.f32 %v478, %v478
    %481 = vadd.xlane.f32.xlu0 %v479
    %v482 = vpop.xlane.xlu0 %481
    %483 = vadd.xlane.f32.xlu0 %v480
    %v484 = vpop.xlane.xlu0 %483
    %v485 = vmul.f32 %v482, 0.03125
    %v486 = vmul.f32 %v484, 0.03125
    %v487 = vadd.f32 %v485, 1e-05
    %v488 = vadd.f32 %v486, 1e-05
    %v489 = vrsqrt.pop %v487
    %v490 = vrsqrt.pop %v488
    %v491 = vmul.f32 %v477, %v489
    %v492 = vmul.f32 %v478, %v490
    %v493 = vlaneseq
    %v494 = vshrl.u32 %v493, 7
    %v495 = vsub.s32 0, %v494
    %v496 = vrot.slane %v467, %v495
    %v497 = vmul.f32 %v491, %v496
    %v498 = vmul.f32 %v492, %v496
    %v499 = vlaneseq
    %v500 = vshrl.u32 %v499, 7
    %v501 = vsub.s32 0, %v500
    %v502 = vrot.slane %v468, %v501
    %v503 = vadd.f32 %v497, %v502
    %v504 = vadd.f32 %v498, %v502
    %v505 = vmax.f32 %v503, 0.0
    %v506 = vmax.f32 %v504, 0.0
    %v507 = vld [vmem:[#allocation8] sm:$0xff]
    %v508 = vld [vmem:[#allocation8 + $0x8] sm:$0xff]
    %v509 = vld [vmem:[#allocation8 + $0x10] sm:$0xff]
    %v510 = vld [vmem:[#allocation8 + $0x18] sm:$0xff]
    %v511 = vld [vmem:[#allocation8 + $0x20] sm:$0xff]
    %v512 = vld [vmem:[#allocation8 + $0x28] sm:$0xff]
    %v513 = vld [vmem:[#allocation8 + $0x30] sm:$0xff]
    %v514 = vld [vmem:[#allocation8 + $0x38] sm:$0xff]
    %v515 = vld [vmem:[#allocation8 + $0x40] sm:$0xff]
    %v516 = vld [vmem:[#allocation8 + $0x48] sm:$0xff]
    %v517 = vld [vmem:[#allocation8 + $0x50] sm:$0xff]
    %v518 = vld [vmem:[#allocation8 + $0x58] sm:$0xff]
    %v519 = vld [vmem:[#allocation8 + $0x60] sm:$0xff]
    %v520 = vld [vmem:[#allocation8 + $0x68] sm:$0xff]
    %v521 = vld [vmem:[#allocation8 + $0x70] sm:$0xff]
    %v522 = vld [vmem:[#allocation8 + $0x78] sm:$0xff]
    %v523 = vld [vmem:[%s5] sm:$0x1]
    %v525 = vlaneseq
    %v526 = vshrl.u32 %v525, 7
    %v527 = vsub.s32 0, %v526
    %v528 = vrot.slane %v523, %v527
    %530 = vmatprep.subr.mxu0 0.0
    %531 = vmatpush1.msra.mxu0 %v507
    %532 = vmatprep.subr.mxu0 0.0
    %533 = vmatpush1.msra.mxu0 %v508
    %534 = vmatprep.subr.mxu0 0.0
    %535 = vmatpush1.msra.mxu0 %v509
    %536 = vmatprep.subr.mxu0 0.0
    %537 = vmatpush1.msra.mxu0 %v510
    %538 = vmatprep.subr.mxu0 0.0
    %539 = vmatpush1.msra.mxu0 %v511
    %540 = vmatprep.subr.mxu0 0.0
    %541 = vmatpush1.msra.mxu0 %v512
    %542 = vmatprep.subr.mxu0 0.0
    %543 = vmatpush1.msra.mxu0 %v513
    %544 = vmatprep.subr.mxu0 0.0
    %545 = vmatpush1.msra.mxu0 %v514
    %546 = vmatprep.subr.mxu0 0.0
    %547 = vmatpush1.msra.mxu0 %v515
    %548 = vmatprep.subr.mxu0 0.0
    %549 = vmatpush1.msra.mxu0 %v516
    %550 = vmatprep.subr.mxu0 0.0
    %551 = vmatpush1.msra.mxu0 %v517
    %552 = vmatprep.subr.mxu0 0.0
    %553 = vmatpush1.msra.mxu0 %v518
    %554 = vmatprep.subr.mxu0 0.0
    %555 = vmatpush1.msra.mxu0 %v519
    %556 = vmatprep.subr.mxu0 0.0
    %557 = vmatpush1.msra.mxu0 %v520
    %558 = vmatprep.subr.mxu0 0.0
    %559 = vmatpush1.msra.mxu0 %v521
    %560 = vmatprep.subr.mxu0 0.0
    %561 = vmatpush1.msra.mxu0 %v522
    %562 = vmatprep.subr.mxu0 0.0
    %563 = vmatpush1.msra.mxu0 0.0
    %564 = vmatprep.subr.mxu0 0.0
    %565 = vmatpush1.msra.mxu0 0.0
    %566 = vmatprep.subr.mxu0 0.0
    %567 = vmatpush1.msra.mxu0 0.0
    %568 = vmatprep.subr.mxu0 0.0
    %569 = vmatpush1.msra.mxu0 0.0
    %570 = vmatprep.subr.mxu0 0.0
    %571 = vmatpush1.msra.mxu0 0.0
    %572 = vmatprep.subr.mxu0 0.0
    %573 = vmatpush1.msra.mxu0 0.0
    %574 = vmatprep.subr.mxu0 0.0
    %575 = vmatpush1.msra.mxu0 0.0
    %576 = vmatprep.subr.mxu0 0.0
    %577 = vmatpush1.msra.mxu0 0.0
    %578 = vmatprep.subr.mxu0 0.0
    %579 = vmatpush1.msra.mxu0 0.0
    %580 = vmatprep.subr.mxu0 0.0
    %581 = vmatpush1.msra.mxu0 0.0
    %582 = vmatprep.subr.mxu0 0.0
    %583 = vmatpush1.msra.mxu0 0.0
    %584 = vmatprep.subr.mxu0 0.0
    %585 = vmatpush1.msra.mxu0 0.0
    %586 = vmatprep.subr.mxu0 0.0
    %587 = vmatpush1.msra.mxu0 0.0
    %588 = vmatprep.subr.mxu0 0.0
    %589 = vmatpush1.msra.mxu0 0.0
    %590 = vmatprep.subr.mxu0 0.0
    %591 = vmatpush1.msra.mxu0 0.0
    %592 = vmatprep.subr.mxu0 0.0
    %593 = vmatpush1.msra.mxu0 0.0
    %594 = vmatprep.mubr.f32.mxu0 0.0
    %595 = vmatmul.mubr.f32.gmra.mrb[0].mxu0 %v505
    %v596 = vpop.f32.mrb[0].mxu0
    %v597 = vadd.f32 %v528, %v596
    %v598 = vpop.f32.mrb[0].mxu0
    %599 = vmatprep.mubr.f32.mxu0 0.0
    %600 = vmatmul.mubr.f32.gmra.mrb[0].mxu0 %v506
    %v601 = vpop.f32.mrb[0].mxu0
    %v602 = vadd.f32 %v528, %v601
    %v603 = vpop.f32.mrb[0].mxu0
    %604 = vdwg.mxu0
    %vm605 = vcmp.lt.s32.totalorder %v95, 4
    %v606 = vsel %vm605, 1, 0
    %vm607 = vcmp.eq.s32.totalorder %v606, 1
    %v608 = vsel %vm607, %v597, -1e+30
    %v609 = vsel %vm607, %v602, -1e+30
    %610 = vmax.xlane.f32.xlu0 %v608
    %v611 = vpop.xlane.xlu0 %610
    %612 = vmax.xlane.f32.xlu0 %v609
    %v613 = vpop.xlane.xlu0 %612
    %v614 = vsub.f32 %v608, %v611
    %v615 = vsub.f32 %v609, %v613
    %v616 = vmul.f32 %v614, 1.442695
    %v617 = vpow.pop %v616
    %v618 = vmul.f32 %v615, 1.442695
    %v619 = vpow.pop %v618
    %620 = vadd.xlane.f32.xlu0 %v617
    %v621 = vpop.xlane.xlu0 %620
    %622 = vadd.xlane.f32.xlu0 %v619
    %v623 = vpop.xlane.xlu0 %622
    %v624 = vrcp.pop %v621
    %v625 = vmul.f32 %v617, %v624
    %v626 = vrcp.pop %v623
    %v627 = vmul.f32 %v619, %v626
    %628 = vst [vmem:[#allocation11] sm:$0xff] %v625
    %629 = vst [vmem:[#allocation11 + $0x8] sm:$0xff] %v627
    // Predicated region
    $region46: #{tpu_custom_call.1} parent=1 // pred_check
      _
    $region47: #{tpu_custom_call.1} parent=1 // pred_check_branch
      %631 = sbr.rel (0) target = $region49
    $region48: #{tpu_custom_call.1} parent=1 // pred_region
      %s633 = ssub.s32 256, 256
      %634 = vsyncadd [#allocation4], %s633
      %s635 = sshll.u32 [#allocation11], 4
      %s636 = int_to_ptr.vmem [resolvable:$true] %s635
      %641 = dma.vmem_to_hbm [thread:$0]  %s636, 256, %s6, [#allocation4], 128, 128, 8
    $region49: #{tpu_custom_call.1} parent=1 // pred_fallthru
      _
    // Predicated region
    $region50: #{tpu_custom_call.1} parent=1 // pred_check
      _
    $region51: #{tpu_custom_call.1} parent=1 // pred_check_branch
      %643 = sbr.rel (0) target = $region53
    $region52: #{tpu_custom_call.1} parent=1 // pred_region
      %644 = dma.done [#allocation4], 256
    $region53: #{tpu_custom_call.1} parent=1 // pred_fallthru
      _
    %645 = vsyncpa [#allocation3], 1
    %646 = vsyncpa [#allocation6], 1
    %647 = vsyncpa [#allocation9], 1
    %648 = vsyncpa [#allocation4], 1

</llo_original>
